<compile_context>
chip_gen: v5e
topology: v5e:2x2
jax: 0.10.0
libtpu: 0.0.40
codegen_flags: <defaults>
</compile_context>

<pallas_src>
import jax
import jax.numpy as jnp
import numpy as np
from jax.experimental import pallas as pl
from jax.experimental.pallas import tpu as pltpu


# ----------------------------------------------------------------- helpers ---
def _round_up(x, m):
    return (x + m - 1) // m * m


# ------------------------------------------------------------------ kernel ---
def _fused_matmul_kernel(p_ref, w_ref, o_ref):
    # One MXU contraction per grid step: (B_blk*M1, KP) x (KP, 128) -> f32.
    o_ref[...] = jnp.dot(p_ref[...], w_ref[...],
                         preferred_element_type=jnp.float32)


# ---------------------------------------------------------------- fused op ---
def fused_two_conv_pallas(x_nhwc, w1_oihw, b1, w2_oihw, b2, *,
                          stride1, dilation1, stride2, dilation2):
    """Returns (v1, v2) = (conv1(x), conv2(conv1(x))) via a single pallas_call."""
    N, H, W, Cin = x_nhwc.shape
    Cout1, _, KH1, KW1 = w1_oihw.shape
    Cout2, Cin2, KH2, KW2 = w2_oihw.shape
    assert Cin2 == Cout1
    assert KH1 == KW1 and KH2 == KW2 and H == W
    assert stride1 * dilation2 == dilation1, "composition needs s1*d2 == d1"

    # spatial geometry
    H1 = (H - dilation1 * (KH1 - 1) - 1) // stride1 + 1      # conv1 output (12)
    H2 = (H1 - dilation2 * (KH2 - 1) - 1) // stride2 + 1     # conv2 output (10)
    KC = KH1 + KH2 - 1                                       # composed kernel (7)
    M1 = H1 * H1
    M1P = _round_up(M1, 8)

    # ---- weights: embed W1 and compose W2*W1 onto the 7x7 tap grid ----------
    w1_hwio = jnp.transpose(w1_oihw, (2, 3, 1, 0)).astype(jnp.float32)  # (5,5,Cin,16)
    w1_embed = jnp.pad(w1_hwio, ((0, KC - KH1), (0, KC - KW1), (0, 0), (0, 0)))
    w_eff = jnp.zeros((KC, KC, Cin, Cout2), jnp.float32)
    for i in range(KH2):
        for j in range(KW2):
            contrib = jnp.einsum('abpc,oc->abpo', w1_hwio, w2_oihw[:, :, i, j])
            w_eff = w_eff.at[i:i + KH1, j:j + KW1].add(contrib)
    b_eff = b2 + jnp.einsum('ocij,c->o', w2_oihw, b1)        # composed conv2 bias

    K_real = KC * KC * Cin                                   # 147
    KP = _round_up(K_real + 1, 128)                          # +1 bias column -> 256
    COUT = Cout1 + Cout2                                     # 48
    CP = _round_up(COUT, 128)                                # 128 (lane dense)

    w_cols = jnp.concatenate([w1_embed, w_eff], axis=-1).reshape(K_real, COUT)
    bias_row = jnp.concatenate([b1, b_eff]).reshape(1, COUT).astype(jnp.float32)
    w_all = jnp.pad(jnp.concatenate([w_cols, bias_row], axis=0),
                    ((0, KP - (K_real + 1)), (0, CP - COUT)))

    # ---- im2col: every tap / stride is a multiple of dilation1, so one ------
    # ---- ::dilation1 subsample of x covers all 49 composed taps -------------
    step = dilation1
    x_sub = x_nhwc[:, ::step, ::step, :]
    need = H1 + KC - 1
    x_sub = jnp.pad(x_sub, ((0, 0),
                            (0, need - x_sub.shape[1]),
                            (0, need - x_sub.shape[2]),
                            (0, 0)))
    taps = []
    for m in range(KC):
        for n in range(KC):
            taps.append(x_sub[:, m:m + H1, n:n + H1, :].reshape(N, M1, Cin))
    patches = jnp.concatenate(
        taps + [jnp.ones((N, M1, 1), jnp.float32)], axis=-1)  # ones column = biases
    patches = jnp.pad(patches, ((0, 0), (0, M1P - M1), (0, KP - (K_real + 1))))
    patches = patches.reshape(N * M1P, KP)

    # ---- single-dot pallas_call; batch blocked into the matmul M ------------
    b_blk = max(d for d in range(1, min(N, 16) + 1) if N % d == 0)
    out = pl.pallas_call(
        _fused_matmul_kernel,
        out_shape=jax.ShapeDtypeStruct((N * M1P, CP), jnp.float32),
        grid_spec=pltpu.PrefetchScalarGridSpec(
            num_scalar_prefetch=0,
            grid=(N // b_blk,),
            in_specs=[pl.BlockSpec((b_blk * M1P, KP), lambda i: (i, 0)),
                      pl.BlockSpec((KP, CP), lambda i: (0, 0))],
            out_specs=pl.BlockSpec((b_blk * M1P, CP), lambda i: (i, 0)),
        ),
        compiler_params=pltpu.CompilerParams(
            dimension_semantics=("parallel",)),
    )(patches, w_all)

    out = out.reshape(N, M1P, CP)[:, :M1, :].reshape(N, H1, H1, CP)
    v1 = out[..., :Cout1]                                    # (N, 12, 12, 16)
    v2 = out[:, :H2, :H2, Cout1:COUT]                        # (N, 10, 10, 32)
    return v1, v2


# --------------------------------------------------------------- reference ---
def conv2d_ref(x_nhwc, w_oihw, bias, *, stride, dilation):
    w_hwio = jnp.transpose(w_oihw, (2, 3, 1, 0))
    y = jax.lax.conv_general_dilated(
        x_nhwc, w_hwio, window_strides=(stride, stride), padding="VALID",
        rhs_dilation=(dilation, dilation),
        dimension_numbers=("NHWC", "HWIO", "NHWC"))
    return y + bias.reshape(1, 1, 1, -1)


# ------------------------------------------------------------------- model ---
def init_conv_params(key, cout, cin, k):
    """Deterministic PyTorch-style uniform(-1/sqrt(fan_in), 1/sqrt(fan_in)) init."""
    kw, kb = jax.random.split(key)
    fan_in = cin * k * k
    bound = 1.0 / np.sqrt(fan_in)
    w = jax.random.uniform(kw, (cout, cin, k, k), jnp.float32, -bound, bound)
    b = jax.random.uniform(kb, (cout,), jnp.float32, -bound, bound)
    return w, b


@jax.jit
def model_forward(x_nchw, params):
    (w1, b1), (w2, b2) = params
    x_nhwc = jnp.transpose(x_nchw, (0, 2, 3, 1))
    v1, v2 = fused_two_conv_pallas(x_nhwc, w1, b1, w2, b2,
                                   stride1=2, dilation1=2,
                                   stride2=1, dilation2=1)
    # TODO(synk): original module computes v3 = v1 + v2, but (N,16,12,12) and
    # (N,32,10,10) are not broadcast-compatible — the PyTorch forward always
    # raises; returning (v1, v2) instead of faking an add.
    return jnp.transpose(v1, (0, 3, 1, 2)), jnp.transpose(v2, (0, 3, 1, 2))


if __name__ == "__main__":
    key = jax.random.PRNGKey(0)
    k_x, k_c1, k_c2 = jax.random.split(key, 3)

    x1 = jax.random.normal(k_x, (1, 3, 32, 32), jnp.float32)   # NCHW like torch
    params = (init_conv_params(k_c1, 16, 3, 5),
              init_conv_params(k_c2, 32, 16, 3))

    v1, v2 = jax.block_until_ready(model_forward(x1, params))
    assert v1.shape == (1, 16, 12, 12), v1.shape
    assert v2.shape == (1, 32, 10, 10), v2.shape

    # correctness check of the fused Pallas path against lax.conv
    x_nhwc = jnp.transpose(x1, (0, 2, 3, 1))
    (w1, b1), (w2, b2) = params
    r1 = conv2d_ref(x_nhwc, w1, b1, stride=2, dilation=2)
    r2 = conv2d_ref(jnp.asarray(r1), w2, b2, stride=1, dilation=1)
    np.testing.assert_allclose(np.asarray(jnp.transpose(v1, (0, 2, 3, 1))),
                               np.asarray(r1), atol=2e-5, rtol=2e-5)
    np.testing.assert_allclose(np.asarray(jnp.transpose(v2, (0, 2, 3, 1))),
                               np.asarray(r2), atol=2e-4, rtol=2e-4)

    print("KERNEL_OK")
</pallas_src>

<mosaic_0001>
module attributes {stable_mosaic.version = 11 : i64} {
  func.func @_fused_matmul_kernel(%arg0: i32, %arg1: memref<144x256xf32, #tpu.memory_space<vmem>>, %arg2: memref<256x128xf32, #tpu.memory_space<vmem>>, %arg3: memref<144x128xf32, #tpu.memory_space<vmem>>) attributes {dimension_semantics = [#tpu.dimension_semantics<parallel>], iteration_bounds = array<i64: 1>, scalar_prefetch = 0 : i64, scratch_operands = 0 : i64, tpu.core_type = #tpu.core_type<tc>, window_params = [{transform_indices = @transform_0, window_bounds = array<i64: 144, 256>}, {pipeline_mode = #tpu.pipeline_mode<synchronous>, transform_indices = @transform_1, window_bounds = array<i64: 256, 128>}, {transform_indices = @transform_2, window_bounds = array<i64: 144, 128>}]} {
    %c0 = arith.constant 0 : index
    %c0_0 = arith.constant 0 : index
    %0 = vector.load %arg1[%c0, %c0_0] : memref<144x256xf32, #tpu.memory_space<vmem>>, vector<144x256xf32>
    %c0_1 = arith.constant 0 : index
    %c0_2 = arith.constant 0 : index
    %1 = vector.load %arg2[%c0_1, %c0_2] : memref<256x128xf32, #tpu.memory_space<vmem>>, vector<256x128xf32>
    %cst = arith.constant dense<0.000000e+00> : vector<144x128xf32>
    %2 = tpu.matmul %0, %1, %cst {dimension_numbers = #tpu.dot_dimension_numbers<[1], [0], [0], [1], [0, 0, 1, 1], [], []>} : vector<144x256xf32>, vector<256x128xf32>, vector<144x128xf32> -> vector<144x128xf32>
    %c0_3 = arith.constant 0 : index
    %c0_4 = arith.constant 0 : index
    %3 = vector.load %arg3[%c0_3, %c0_4] : memref<144x128xf32, #tpu.memory_space<vmem>>, vector<144x128xf32>
    tpu.vector_store %arg3[%c0_3, %c0_4], %2 {strides = array<i32>} : memref<144x128xf32, #tpu.memory_space<vmem>>, vector<144x128xf32>,
    return
  }
  func.func @transform_0(%arg0: i32) -> (i32, i32) {
    %c0_i32 = arith.constant 0 : i32
    %c0_i32_0 = arith.constant 0 : i32
    return %arg0, %c0_i32 : i32, i32
  }
  func.func @transform_1(%arg0: i32) -> (i32, i32) {
    %c0_i32 = arith.constant 0 : i32
    %c0_i32_0 = arith.constant 0 : i32
    %c0_i32_1 = arith.constant 0 : i32
    return %c0_i32, %c0_i32_0 : i32, i32
  }
  func.func @transform_2(%arg0: i32) -> (i32, i32) {
    %c0_i32 = arith.constant 0 : i32
    %c0_i32_0 = arith.constant 0 : i32
    return %arg0, %c0_i32 : i32, i32
  }
}

</mosaic_0001>

<llo_original>
// kernel: model_forward.1
$region0: #{model_forward.1}
  #allocation0 [shape = 'u32[]', space=smem, size = 0x4, offset = 0x4, fixed_abs, tag = 'smem constant byte address 0x4 - core index']
  #allocation1 [shape = 'u32[72,128]{1,0:T(1,128)}', space=vmem, size = 0x9000, scoped, tag = 'internal scratch']
  %s0 = inlined_call_operand.vmem [shape: f32[144,256], index: 0, kind: input, shape index: {}]
  %s1 = inlined_call_operand.vmem [shape: f32[256,128], index: 1, kind: input, shape index: {}]
  %s2 = inlined_call_operand.vmem [shape: f32[144,128], index: 2, kind: output, shape index: {}]
  %s3 = sld [smem:[#allocation0]]
  $region18: #{model_forward.1} parent=0
    _
  %s5 = ssub.s32 1, %s3
  %s6 = scalar_select 0, %s5, %s3
  // Predicated region
  $region2: #{model_forward.1} parent=0 // pred_check
    _
  $region3: #{model_forward.1} parent=0 // pred_check_branch
    %8 = sbr.rel (0) target = $region5
  $region4: #{model_forward.1} parent=0 // pred_region
    _
  $region5: #{model_forward.1} parent=0 // pred_fallthru
    _
  // Predicated region
  $region6: #{model_forward.1} parent=0 // pred_check
    _
  $region7: #{model_forward.1} parent=0 // pred_check_branch
    %10 = sbr.rel (0) target = $region9
  $region8: #{model_forward.1} parent=0 // pred_region
    _
  $region9: #{model_forward.1} parent=0 // pred_fallthru
    _
  %v11 = vld [vmem:[%s0] sm:$0xff]
  %v12 = vld [vmem:[%s0 + $0x8] sm:$0xff]
  %v13 = vld [vmem:[%s0 + $0x10] sm:$0xff]
  %v14 = vld [vmem:[%s0 + $0x18] sm:$0xff]
  %v15 = vld [vmem:[%s0 + $0x20] sm:$0xff]
  %v16 = vld [vmem:[%s0 + $0x28] sm:$0xff]
  %v17 = vld [vmem:[%s0 + $0x30] sm:$0xff]
  %v18 = vld [vmem:[%s0 + $0x38] sm:$0xff]
  %v19 = vld [vmem:[%s0 + $0x40] sm:$0xff]
  %v20 = vld [vmem:[%s0 + $0x48] sm:$0xff]
  %v21 = vld [vmem:[%s0 + $0x50] sm:$0xff]
  %v22 = vld [vmem:[%s0 + $0x58] sm:$0xff]
  %v23 = vld [vmem:[%s0 + $0x60] sm:$0xff]
  %v24 = vld [vmem:[%s0 + $0x68] sm:$0xff]
  %v25 = vld [vmem:[%s0 + $0x70] sm:$0xff]
  %v26 = vld [vmem:[%s0 + $0x78] sm:$0xff]
  %v27 = vld [vmem:[%s0 + $0x80] sm:$0xff]
  %v28 = vld [vmem:[%s0 + $0x88] sm:$0xff]
  %v29 = vld [vmem:[%s0 + $0x90] sm:$0xff]
  %v30 = vld [vmem:[%s0 + $0x98] sm:$0xff]
  %v31 = vld [vmem:[%s0 + $0xa0] sm:$0xff]
  %v32 = vld [vmem:[%s0 + $0xa8] sm:$0xff]
  %v33 = vld [vmem:[%s0 + $0xb0] sm:$0xff]
  %v34 = vld [vmem:[%s0 + $0xb8] sm:$0xff]
  %v35 = vld [vmem:[%s0 + $0xc0] sm:$0xff]
  %v36 = vld [vmem:[%s0 + $0xc8] sm:$0xff]
  %v37 = vld [vmem:[%s0 + $0xd0] sm:$0xff]
  %v38 = vld [vmem:[%s0 + $0xd8] sm:$0xff]
  %v39 = vld [vmem:[%s0 + $0xe0] sm:$0xff]
  %v40 = vld [vmem:[%s0 + $0xe8] sm:$0xff]
  %v41 = vld [vmem:[%s0 + $0xf0] sm:$0xff]
  %v42 = vld [vmem:[%s0 + $0xf8] sm:$0xff]
  %v43 = vld [vmem:[%s0 + $0x100] sm:$0xff]
  %v44 = vld [vmem:[%s0 + $0x108] sm:$0xff]
  %v45 = vld [vmem:[%s0 + $0x110] sm:$0xff]
  %v46 = vld [vmem:[%s0 + $0x118] sm:$0xff]
  %v47 = vld [vmem:[%s1] sm:$0xff]
  %v48 = vld [vmem:[%s1 + $0x8] sm:$0xff]
  %v49 = vld [vmem:[%s1 + $0x10] sm:$0xff]
  %v50 = vld [vmem:[%s1 + $0x18] sm:$0xff]
  %v51 = vld [vmem:[%s1 + $0x20] sm:$0xff]
  %v52 = vld [vmem:[%s1 + $0x28] sm:$0xff]
  %v53 = vld [vmem:[%s1 + $0x30] sm:$0xff]
  %v54 = vld [vmem:[%s1 + $0x38] sm:$0xff]
  %v55 = vld [vmem:[%s1 + $0x40] sm:$0xff]
  %v56 = vld [vmem:[%s1 + $0x48] sm:$0xff]
  %v57 = vld [vmem:[%s1 + $0x50] sm:$0xff]
  %v58 = vld [vmem:[%s1 + $0x58] sm:$0xff]
  %v59 = vld [vmem:[%s1 + $0x60] sm:$0xff]
  %v60 = vld [vmem:[%s1 + $0x68] sm:$0xff]
  %v61 = vld [vmem:[%s1 + $0x70] sm:$0xff]
  %v62 = vld [vmem:[%s1 + $0x78] sm:$0xff]
  %v63 = vld [vmem:[%s1 + $0x80] sm:$0xff]
  %v64 = vld [vmem:[%s1 + $0x88] sm:$0xff]
  %v65 = vld [vmem:[%s1 + $0x90] sm:$0xff]
  %v66 = vld [vmem:[%s1 + $0x98] sm:$0xff]
  %v67 = vld [vmem:[%s1 + $0xa0] sm:$0xff]
  %v68 = vld [vmem:[%s1 + $0xa8] sm:$0xff]
  %v69 = vld [vmem:[%s1 + $0xb0] sm:$0xff]
  %v70 = vld [vmem:[%s1 + $0xb8] sm:$0xff]
  %v71 = vld [vmem:[%s1 + $0xc0] sm:$0xff]
  %v72 = vld [vmem:[%s1 + $0xc8] sm:$0xff]
  %v73 = vld [vmem:[%s1 + $0xd0] sm:$0xff]
  %v74 = vld [vmem:[%s1 + $0xd8] sm:$0xff]
  %v75 = vld [vmem:[%s1 + $0xe0] sm:$0xff]
  %v76 = vld [vmem:[%s1 + $0xe8] sm:$0xff]
  %v77 = vld [vmem:[%s1 + $0xf0] sm:$0xff]
  %v78 = vld [vmem:[%s1 + $0xf8] sm:$0xff]
  %79 = vmatpush.msra.mxu0 %v62
  %80 = vmatpush.msra.mxu0 %v61
  %81 = vmatpush.msra.mxu0 %v60
  %82 = vmatpush.msra.mxu0 %v59
  %83 = vmatpush.msra.mxu0 %v58
  %84 = vmatpush.msra.mxu0 %v57
  %85 = vmatpush.msra.mxu0 %v56
  %86 = vmatpush.msra.mxu0 %v55
  %87 = vmatpush.msra.mxu0 %v54
  %88 = vmatpush.msra.mxu0 %v53
  %89 = vmatpush.msra.mxu0 %v52
  %90 = vmatpush.msra.mxu0 %v51
  %91 = vmatpush.msra.mxu0 %v50
  %92 = vmatpush.msra.mxu0 %v49
  %93 = vmatpush.msra.mxu0 %v48
  %94 = vmatpush.msra.mxu0 %v47
  %95 = vmatmul.f32.gmra.mxu0 %v11
  %v96 = vpop.f32.mrf.mxu0
  %v97 = vadd.f32 0.0, %v96
  %98 = vmatmul.f32.gmra.mxu0 %v13
  %v99 = vpop.f32.mrf.mxu0
  %v100 = vadd.f32 0.0, %v99
  %101 = vmatmul.f32.gmra.mxu0 %v15
  %v102 = vpop.f32.mrf.mxu0
  %v103 = vadd.f32 0.0, %v102
  %104 = vmatmul.f32.gmra.mxu0 %v17
  %v105 = vpop.f32.mrf.mxu0
  %v106 = vadd.f32 0.0, %v105
  %107 = vmatmul.f32.gmra.mxu0 %v19
  %v108 = vpop.f32.mrf.mxu0
  %v109 = vadd.f32 0.0, %v108
  %110 = vmatmul.f32.gmra.mxu0 %v21
  %v111 = vpop.f32.mrf.mxu0
  %v112 = vadd.f32 0.0, %v111
  %113 = vmatmul.f32.gmra.mxu0 %v23
  %v114 = vpop.f32.mrf.mxu0
  %v115 = vadd.f32 0.0, %v114
  %116 = vmatmul.f32.gmra.mxu0 %v25
  %v117 = vpop.f32.mrf.mxu0
  %v118 = vadd.f32 0.0, %v117
  %119 = vmatmul.f32.gmra.mxu0 %v27
  %v120 = vpop.f32.mrf.mxu0
  %v121 = vadd.f32 0.0, %v120
  %122 = vmatmul.f32.gmra.mxu0 %v29
  %v123 = vpop.f32.mrf.mxu0
  %v124 = vadd.f32 0.0, %v123
  %125 = vmatmul.f32.gmra.mxu0 %v31
  %v126 = vpop.f32.mrf.mxu0
  %v127 = vadd.f32 0.0, %v126
  %128 = vmatmul.f32.gmra.mxu0 %v33
  %v129 = vpop.f32.mrf.mxu0
  %v130 = vadd.f32 0.0, %v129
  %131 = vmatmul.f32.gmra.mxu0 %v35
  %v132 = vpop.f32.mrf.mxu0
  %v133 = vadd.f32 0.0, %v132
  %134 = vmatmul.f32.gmra.mxu0 %v37
  %v135 = vpop.f32.mrf.mxu0
  %v136 = vadd.f32 0.0, %v135
  %137 = vmatmul.f32.gmra.mxu0 %v39
  %v138 = vpop.f32.mrf.mxu0
  %v139 = vadd.f32 0.0, %v138
  %140 = vmatmul.f32.gmra.mxu0 %v41
  %v141 = vpop.f32.mrf.mxu0
  %v142 = vadd.f32 0.0, %v141
  %143 = vmatmul.f32.gmra.mxu0 %v43
  %v144 = vpop.f32.mrf.mxu0
  %v145 = vadd.f32 0.0, %v144
  %146 = vmatmul.f32.gmra.mxu0 %v45
  %v147 = vpop.f32.mrf.mxu0
  %v148 = vadd.f32 0.0, %v147
  %149 = vdwg.mxu0
  %150 = vmatpush.msra.mxu0 %v78
  %151 = vmatpush.msra.mxu0 %v77
  %152 = vmatpush.msra.mxu0 %v76
  %153 = vmatpush.msra.mxu0 %v75
  %154 = vmatpush.msra.mxu0 %v74
  %155 = vmatpush.msra.mxu0 %v73
  %156 = vmatpush.msra.mxu0 %v72
  %157 = vmatpush.msra.mxu0 %v71
  %158 = vmatpush.msra.mxu0 %v70
  %159 = vmatpush.msra.mxu0 %v69
  %160 = vmatpush.msra.mxu0 %v68
  %161 = vmatpush.msra.mxu0 %v67
  %162 = vmatpush.msra.mxu0 %v66
  %163 = vmatpush.msra.mxu0 %v65
  %164 = vmatpush.msra.mxu0 %v64
  %165 = vmatpush.msra.mxu0 %v63
  %166 = vmatmul.f32.gmra.mxu0 %v12
  %v167 = vpop.f32.mrf.mxu0
  %v168 = vadd.f32 %v97, %v167
  %169 = vmatmul.f32.gmra.mxu0 %v14
  %v170 = vpop.f32.mrf.mxu0
  %v171 = vadd.f32 %v100, %v170
  %172 = vmatmul.f32.gmra.mxu0 %v16
  %v173 = vpop.f32.mrf.mxu0
  %v174 = vadd.f32 %v103, %v173
  %175 = vmatmul.f32.gmra.mxu0 %v18
  %v176 = vpop.f32.mrf.mxu0
  %v177 = vadd.f32 %v106, %v176
  %178 = vmatmul.f32.gmra.mxu0 %v20
  %v179 = vpop.f32.mrf.mxu0
  %v180 = vadd.f32 %v109, %v179
  %181 = vmatmul.f32.gmra.mxu0 %v22
  %v182 = vpop.f32.mrf.mxu0
  %v183 = vadd.f32 %v112, %v182
  %184 = vmatmul.f32.gmra.mxu0 %v24
  %v185 = vpop.f32.mrf.mxu0
  %v186 = vadd.f32 %v115, %v185
  %187 = vmatmul.f32.gmra.mxu0 %v26
  %v188 = vpop.f32.mrf.mxu0
  %v189 = vadd.f32 %v118, %v188
  %190 = vmatmul.f32.gmra.mxu0 %v28
  %v191 = vpop.f32.mrf.mxu0
  %v192 = vadd.f32 %v121, %v191
  %193 = vmatmul.f32.gmra.mxu0 %v30
  %v194 = vpop.f32.mrf.mxu0
  %v195 = vadd.f32 %v124, %v194
  %196 = vmatmul.f32.gmra.mxu0 %v32
  %v197 = vpop.f32.mrf.mxu0
  %v198 = vadd.f32 %v127, %v197
  %199 = vmatmul.f32.gmra.mxu0 %v34
  %v200 = vpop.f32.mrf.mxu0
  %v201 = vadd.f32 %v130, %v200
  %202 = vmatmul.f32.gmra.mxu0 %v36
  %v203 = vpop.f32.mrf.mxu0
  %v204 = vadd.f32 %v133, %v203
  %205 = vmatmul.f32.gmra.mxu0 %v38
  %v206 = vpop.f32.mrf.mxu0
  %v207 = vadd.f32 %v136, %v206
  %208 = vmatmul.f32.gmra.mxu0 %v40
  %v209 = vpop.f32.mrf.mxu0
  %v210 = vadd.f32 %v139, %v209
  %211 = vmatmul.f32.gmra.mxu0 %v42
  %v212 = vpop.f32.mrf.mxu0
  %v213 = vadd.f32 %v142, %v212
  %214 = vmatmul.f32.gmra.mxu0 %v44
  %v215 = vpop.f32.mrf.mxu0
  %v216 = vadd.f32 %v145, %v215
  %217 = vmatmul.f32.gmra.mxu0 %v46
  %v218 = vpop.f32.mrf.mxu0
  %v219 = vadd.f32 %v148, %v218
  %220 = vdwg.mxu0
  %221 = vst [vmem:[%s2] sm:$0xff] %v168
  %222 = vst [vmem:[%s2 + $0x8] sm:$0xff] %v171
  %223 = vst [vmem:[%s2 + $0x10] sm:$0xff] %v174
  %224 = vst [vmem:[%s2 + $0x18] sm:$0xff] %v177
  %225 = vst [vmem:[%s2 + $0x20] sm:$0xff] %v180
  %226 = vst [vmem:[%s2 + $0x28] sm:$0xff] %v183
  %227 = vst [vmem:[%s2 + $0x30] sm:$0xff] %v186
  %228 = vst [vmem:[%s2 + $0x38] sm:$0xff] %v189
  %229 = vst [vmem:[%s2 + $0x40] sm:$0xff] %v192
  %230 = vst [vmem:[%s2 + $0x48] sm:$0xff] %v195
  %231 = vst [vmem:[%s2 + $0x50] sm:$0xff] %v198
  %232 = vst [vmem:[%s2 + $0x58] sm:$0xff] %v201
  %233 = vst [vmem:[%s2 + $0x60] sm:$0xff] %v204
  %234 = vst [vmem:[%s2 + $0x68] sm:$0xff] %v207
  %235 = vst [vmem:[%s2 + $0x70] sm:$0xff] %v210
  %236 = vst [vmem:[%s2 + $0x78] sm:$0xff] %v213
  %237 = vst [vmem:[%s2 + $0x80] sm:$0xff] %v216
  %238 = vst [vmem:[%s2 + $0x88] sm:$0xff] %v219
  // Predicated region
  $region10: #{model_forward.1} parent=0 // pred_check
    _
  $region11: #{model_forward.1} parent=0 // pred_check_branch
    %240 = sbr.rel (0) target = $region13
  $region12: #{model_forward.1} parent=0 // pred_region
    _
  $region13: #{model_forward.1} parent=0 // pred_fallthru
    _
  // Predicated region
  $region14: #{model_forward.1} parent=0 // pred_check
    _
  $region15: #{model_forward.1} parent=0 // pred_check_branch
    %242 = sbr.rel (0) target = $region17
  $region16: #{model_forward.1} parent=0 // pred_region
    _
  $region17: #{model_forward.1} parent=0 // pred_fallthru
    _

</llo_original>
